<compile_context>
chip_gen: v7x
topology: tpu7x:2x2x1
jax: 0.10.0
libtpu: 0.0.40
codegen_flags: <defaults>
</compile_context>

<pallas_src>
import math

import jax
import jax.numpy as jnp
from jax.experimental import pallas as pl
from jax.experimental.pallas import tpu as pltpu


def _pe_add_kernel(x_ref, pe_ref, o_ref):
    # Pure VPU add; pe_ref (1, tR, lanes) broadcasts over the folded batch dim.
    o_ref[...] = x_ref[...] + pe_ref[...]


def make_positional_encoding(d_model: int, block_size: int) -> jax.Array:
    """Plain-JAX replica of the PyTorch buffer construction. Shape (1, block_size, d_model)."""
    position = jnp.arange(block_size, dtype=jnp.float32)[:, None]
    div_term = jnp.exp(jnp.arange(0, d_model, 2, dtype=jnp.float32)
                       * (-math.log(10000.0) / d_model))
    pe = jnp.zeros((block_size, d_model), dtype=jnp.float32)
    pe = pe.at[:, 0::2].set(jnp.sin(position * div_term))
    pe = pe.at[:, 1::2].set(jnp.cos(position * div_term))
    return pe[None]  # (1, block_size, d_model)


_VMEM_BUDGET_BYTES = 24 * 1024 * 1024  # conservative: fits v5e / v6e / v7x


def sinusoidal_positional_encoding(x: jax.Array, pe: jax.Array) -> jax.Array:
    """Forward pass (eval mode): x + pe[:, :T, :].  x: (B, T, D), pe: (1, block_size, D)."""
    B, T, D = x.shape
    assert pe.shape[0] == 1 and pe.shape[2] == D
    assert T <= pe.shape[1], "sequence length exceeds block_size"
    pe_t = pe[:, :T, :].astype(x.dtype)  # (1, T, D)

    # Lane-dense layout: flatten (T, D) -> (rows, 128) when possible so the
    # output stores are full-width (unmasked) vst.
    if (T * D) % 128 == 0:
        lanes = 128
        rows = (T * D) // 128
    else:
        lanes = D
        rows = T
    x2 = x.reshape(B, rows, lanes)
    pe2 = pe_t.reshape(1, rows, lanes)

    itemsize = x2.dtype.itemsize
    b_blk = min(B, 8)

    # Row tile: as many rows as fit the budget with double-buffered x-in, out
    # and the (single-batch) pe tile; aligned to 8 sublanes; capped at `rows`.
    bytes_per_row = (2 * b_blk + 1) * 2 * lanes * itemsize
    max_rows = max(8, _VMEM_BUDGET_BYTES // bytes_per_row)
    t_rows = min(rows, (max_rows // 8) * 8)
    if t_rows <= 0 or t_rows > rows:
        t_rows = rows

    # Row tiles OUTER, batch inner -> the pe tile (which ignores the batch axis)
    # stays resident across the inner batch sweep.
    grid = (pl.cdiv(rows, t_rows), pl.cdiv(B, b_blk))

    out2 = pl.pallas_call(
        _pe_add_kernel,
        out_shape=jax.ShapeDtypeStruct((B, rows, lanes), x.dtype),
        grid_spec=pltpu.PrefetchScalarGridSpec(
            num_scalar_prefetch=0,
            grid=grid,
            in_specs=[
                pl.BlockSpec((b_blk, t_rows, lanes), lambda r, b: (b, r, 0)),
                # Same PE block for every batch step -> re-DMA'd only when the
                # row tile (outer axis) changes.
                pl.BlockSpec((1, t_rows, lanes), lambda r, b: (0, r, 0)),
            ],
            out_specs=pl.BlockSpec((b_blk, t_rows, lanes), lambda r, b: (b, r, 0)),
        ),
        compiler_params=pltpu.CompilerParams(
            dimension_semantics=("parallel", "parallel"),
            vmem_limit_bytes=32 * 1024 * 1024,
        ),
    )(x2, pe2)

    return out2.reshape(B, T, D)


if __name__ == "__main__":
    d_model = 32
    block_size = 16
    B, T = 2, 8

    key = jax.random.PRNGKey(0)
    x = jax.random.normal(key, (B, T, d_model), dtype=jnp.float32)

    # The "register_buffer": computed once, outside the hot path.
    pe = make_positional_encoding(d_model, block_size)

    out = sinusoidal_positional_encoding(x, pe)
    out = jax.block_until_ready(out)

    ref = x + pe[:, :T, :]
    assert out.shape == (B, T, d_model)
    assert jnp.allclose(out, ref, atol=1e-6, rtol=1e-6), "mismatch vs reference"

    print("KERNEL_OK")
</pallas_src>

<mosaic_0001>
module attributes {stable_mosaic.version = 11 : i64} {
  func.func @_pe_add_kernel(%arg0: i32, %arg1: i32, %arg2: memref<2x2x128xf32, #tpu.memory_space<vmem>>, %arg3: memref<1x2x128xf32, #tpu.memory_space<vmem>>, %arg4: memref<2x2x128xf32, #tpu.memory_space<vmem>>) attributes {dimension_semantics = [#tpu.dimension_semantics<parallel>, #tpu.dimension_semantics<parallel>], iteration_bounds = array<i64: 1, 1>, scalar_prefetch = 0 : i64, scratch_operands = 0 : i64, tpu.core_type = #tpu.core_type<tc>, window_params = [{transform_indices = @transform_0, window_bounds = array<i64: 2, 2, 128>}, {transform_indices = @transform_1, window_bounds = array<i64: 1, 2, 128>}, {transform_indices = @transform_2, window_bounds = array<i64: 2, 2, 128>}]} {
    %c0 = arith.constant 0 : index
    %c0_0 = arith.constant 0 : index
    %c0_1 = arith.constant 0 : index
    %0 = vector.load %arg2[%c0, %c0_0, %c0_1] : memref<2x2x128xf32, #tpu.memory_space<vmem>>, vector<2x2x128xf32>
    %c0_2 = arith.constant 0 : index
    %c0_3 = arith.constant 0 : index
    %c0_4 = arith.constant 0 : index
    %1 = vector.load %arg3[%c0_2, %c0_3, %c0_4] : memref<1x2x128xf32, #tpu.memory_space<vmem>>, vector<1x2x128xf32>
    %2 = vector.broadcast %1 : vector<1x2x128xf32> to vector<2x2x128xf32>
    %3 = arith.addf %0, %2 : vector<2x2x128xf32>
    %c0_5 = arith.constant 0 : index
    %c0_6 = arith.constant 0 : index
    %c0_7 = arith.constant 0 : index
    %4 = vector.load %arg4[%c0_5, %c0_6, %c0_7] : memref<2x2x128xf32, #tpu.memory_space<vmem>>, vector<2x2x128xf32>
    tpu.vector_store %arg4[%c0_5, %c0_6, %c0_7], %3 {strides = array<i32>} : memref<2x2x128xf32, #tpu.memory_space<vmem>>, vector<2x2x128xf32>,
    return
  }
  func.func @transform_0(%arg0: i32, %arg1: i32) -> (i32, i32, i32) {
    %c0_i32 = arith.constant 0 : i32
    %c0_i32_0 = arith.constant 0 : i32
    return %arg1, %arg0, %c0_i32 : i32, i32, i32
  }
  func.func @transform_1(%arg0: i32, %arg1: i32) -> (i32, i32, i32) {
    %c0_i32 = arith.constant 0 : i32
    %c0_i32_0 = arith.constant 0 : i32
    %c0_i32_1 = arith.constant 0 : i32
    return %c0_i32, %arg0, %c0_i32_0 : i32, i32, i32
  }
  func.func @transform_2(%arg0: i32, %arg1: i32) -> (i32, i32, i32) {
    %c0_i32 = arith.constant 0 : i32
    %c0_i32_0 = arith.constant 0 : i32
    return %arg1, %arg0, %c0_i32 : i32, i32, i32
  }
}

</mosaic_0001>

<llo_original>
// kernel: tpu_custom_call.1
$region0: #{tpu_custom_call.1}
  #allocation0 [shape = 'u32[]', space=smem, size = 0x4, offset = 0x4, fixed_abs, tag = 'smem constant byte address 0x4 - core index']
  #allocation1 [shape = 'u32[144,128]{1,0:T(1,128)}', space=vmem, size = 0x12000, scoped, tag = 'internal scratch']
  %s0 = inlined_call_operand.hbm [shape: f32[2,2,128], index: 0, kind: input, shape index: {}]
  %s1 = inlined_call_operand.vmem [shape: f32[1,2,128], index: 1, kind: input, shape index: {}]
  %s2 = inlined_call_operand.hbm [shape: f32[2,2,128], index: 2, kind: output, shape index: {}]
  %s3 = sld [smem:[#allocation0]]
  $region22: #{tpu_custom_call.1} parent=0
    _
  %s5 = ssub.s32 1, %s3
  %s6 = scalar_select 0, %s5, %s3
  $region1: #{tpu_custom_call.1} parent=0
    #allocation2 [shape = 'u8[2048]{0}', space=vmem, size = 0x800, scoped, tag = 'input window, operand 0, single buffered']
    #allocation3 [shape = 's32[1]{0}', space=sflag, size = 0x4, scoped, tag = 'scoped memory for tpu_custom_call.1']
    #allocation4 [shape = 's32[1]{0}', space=sflag, size = 0x4, scoped, tag = 'scoped memory for tpu_custom_call.1']
    #allocation5 [shape = 'u8[2048]{0}', space=vmem, size = 0x800, scoped, tag = 'output window, operand 0, single buffered']
    %7 = vsyncpa [#allocation3], 0
    %8 = vsyncpa [#allocation4], 0
    // Predicated region
    $region2: #{tpu_custom_call.1} parent=1 // pred_check
      _
    $region3: #{tpu_custom_call.1} parent=1 // pred_check_branch
      %10 = sbr.rel (0) target = $region5
    $region4: #{tpu_custom_call.1} parent=1 // pred_region
      %s12 = ssub.s32 64, 64
      %13 = vsyncadd [#allocation3], %s12
      %s14 = sshll.u32 [#allocation2], 4
      %s15 = int_to_ptr.vmem [resolvable:$true] %s14
      %20 = dma.hbm_to_vmem [thread:$0]  %s0, 64, %s15, [#allocation3], 32, 32, 2
    $region5: #{tpu_custom_call.1} parent=1 // pred_fallthru
      _
    // Predicated region
    $region6: #{tpu_custom_call.1} parent=1 // pred_check
      _
    $region7: #{tpu_custom_call.1} parent=1 // pred_check_branch
      %22 = sbr.rel (0) target = $region9
    $region8: #{tpu_custom_call.1} parent=1 // pred_region
      _
    $region9: #{tpu_custom_call.1} parent=1 // pred_fallthru
      _
    // Predicated region
    $region10: #{tpu_custom_call.1} parent=1 // pred_check
      _
    $region11: #{tpu_custom_call.1} parent=1 // pred_check_branch
      %24 = sbr.rel (0) target = $region13
    $region12: #{tpu_custom_call.1} parent=1 // pred_region
      %25 = dma.done [#allocation3], 64
    $region13: #{tpu_custom_call.1} parent=1 // pred_fallthru
      _
    %v26 = vld [vmem:[#allocation2] sm:$0x3]
    %v27 = vld [vmem:[#allocation2 + $0x2] sm:$0x3]
    %v28 = vld [vmem:[%s1] sm:$0x3]
    %v29 = vadd.f32 %v26, %v28
    %v30 = vadd.f32 %v27, %v28
    %31 = vst [vmem:[#allocation5] sm:$0x3] %v29
    %32 = vst [vmem:[#allocation5 + $0x2] sm:$0x3] %v30
    // Predicated region
    $region14: #{tpu_custom_call.1} parent=1 // pred_check
      _
    $region15: #{tpu_custom_call.1} parent=1 // pred_check_branch
      %34 = sbr.rel (0) target = $region17
    $region16: #{tpu_custom_call.1} parent=1 // pred_region
      %s36 = ssub.s32 64, 64
      %37 = vsyncadd [#allocation4], %s36
      %s38 = sshll.u32 [#allocation5], 4
      %s39 = int_to_ptr.vmem [resolvable:$true] %s38
      %44 = dma.vmem_to_hbm [thread:$0]  %s39, 64, %s2, [#allocation4], 32, 32, 2
    $region17: #{tpu_custom_call.1} parent=1 // pred_fallthru
      _
    // Predicated region
    $region18: #{tpu_custom_call.1} parent=1 // pred_check
      _
    $region19: #{tpu_custom_call.1} parent=1 // pred_check_branch
      %46 = sbr.rel (0) target = $region21
    $region20: #{tpu_custom_call.1} parent=1 // pred_region
      %47 = dma.done [#allocation4], 64
    $region21: #{tpu_custom_call.1} parent=1 // pred_fallthru
      _
    %48 = vsyncpa [#allocation3], 1
    %49 = vsyncpa [#allocation4], 1

</llo_original>
